<compile_context>
chip_gen: v7x
topology: tpu7x:2x2x1
jax: 0.10.0
libtpu: 0.0.40
codegen_flags: <defaults>
</compile_context>

<pallas_src>
import jax
import jax.numpy as jnp
from jax.experimental import pallas as pl
from jax.experimental.pallas import tpu as pltpu


_MAX_TILE_ROWS = 1024                 # up to (1024, 1024) f32 = 4 MiB per tile
_VMEM_LIMIT_BYTES = 32 * 1024 * 1024  # covers 24 MiB combine footprint on v5e too


def _round_up(x, m):
    return (x + m - 1) // m * m


def _sublanes(dtype):
    return {4: 8, 2: 16, 1: 32}.get(jnp.dtype(dtype).itemsize, 8)


def _layout(total, dtype):
    """Lane-dense layout: (lanes, rows, tile_rows, padded_total).

    padded_total == total  =>  the reshape to (rows, lanes) is a free view
    (no pad copy).  rows is always a multiple of the sublane pack so row
    tiles never exceed the array extent.
    """
    sub = _sublanes(dtype)
    lanes = None
    # Prefer a width that divides total (no pad) AND gives sublane-aligned rows.
    for c in (1024, 512, 256, 128):
        if total % c == 0 and (total // c) % sub == 0:
            lanes = c
            break
    if lanes is None:
        for c in (1024, 512, 256, 128):
            if total % c == 0:
                lanes = c
                break
    if lanes is None:
        lanes = 128  # unaligned fallback: small zero pad below
    rows = _round_up(pl.cdiv(total, lanes), sub)
    padded_total = rows * lanes
    n_tiles = pl.cdiv(rows, _MAX_TILE_ROWS)
    tile_rows = min(_round_up(pl.cdiv(rows, n_tiles), sub), rows)
    return lanes, rows, tile_rows, padded_total


def _to_2d(x, lanes, padded_total):
    flat = x.reshape(-1)
    if padded_total != flat.shape[0]:
        # Rare fallback (element count not a multiple of 128): tiny zero pad.
        flat = jnp.pad(flat, (0, padded_total - flat.shape[0]))
    return flat.reshape(padded_total // lanes, lanes)


# ----------------------------- pass 1: moments -----------------------------
def _feat_index_map(inner_tiles, num_row_tiles):
    def index_map(c, i):
        blk = c * inner_tiles + i
        # Clamp so the DMA stays in bounds when the 2-way split over-runs;
        # the kernel masks the duplicated/partial rows by true row count.
        return (jnp.minimum(blk, num_row_tiles - 1), 0)
    return index_map


def _make_moments_kernel(rows, tile_rows, inner_tiles, needs_mask):
    def kernel(f1_ref, f2_ref, s1_ref, q1_ref, s2_ref, q2_ref):
        i = pl.program_id(1)

        @pl.when(i == 0)
        def _():
            s1_ref[...] = jnp.zeros_like(s1_ref)
            q1_ref[...] = jnp.zeros_like(q1_ref)
            s2_ref[...] = jnp.zeros_like(s2_ref)
            q2_ref[...] = jnp.zeros_like(q2_ref)

        f1 = f1_ref[...].astype(jnp.float32)
        f2 = f2_ref[...].astype(jnp.float32)

        if needs_mask:
            c = pl.program_id(0)
            start = (c * inner_tiles + i) * tile_rows
            row_id = jax.lax.broadcasted_iota(jnp.int32, (tile_rows, 1), 0) + start
            valid = row_id < rows
            f1 = jnp.where(valid, f1, 0.0)
            f2 = jnp.where(valid, f2, 0.0)

        lanes = f1.shape[1]
        f1g = f1.reshape(-1, 8, lanes)   # group sublanes -> VALU-only reduce
        f2g = f2.reshape(-1, 8, lanes)
        s1_ref[...] += jnp.sum(f1g, axis=0)
        q1_ref[...] += jnp.sum(f1g * f1g, axis=0)
        s2_ref[...] += jnp.sum(f2g, axis=0)
        q2_ref[...] += jnp.sum(f2g * f2g, axis=0)

    return kernel


# ---------------------------- pass 2: combine -------------------------------
def _combine_kernel(a1_ref, z1_ref, z2_ref, out_ref):
    a1 = a1_ref[0, 0]                 # scalar weight from SMEM
    a2 = 1.0 - a1
    out_ref[...] = (z1_ref[...].astype(jnp.float32) * a1
                    + z2_ref[...].astype(jnp.float32) * a2).astype(out_ref.dtype)


@jax.jit
def fuse(feature1, feature2, z1, z2):
    """JAX/Pallas equivalent of Fuse.forward."""
    assert feature1.shape == feature2.shape, "feature1/feature2 must match"
    assert z1.shape == z2.shape, "z1/z2 must match"

    # -------- pass 1: streaming per-lane sums of x and x^2 --------
    n = feature1.size
    lanes_f, rows_f, tile_f, padded_f = _layout(n, feature1.dtype)
    f1_2d = _to_2d(feature1, lanes_f, padded_f)
    f2_2d = _to_2d(feature2, lanes_f, padded_f)

    num_row_tiles = pl.cdiv(rows_f, tile_f)
    inner = pl.cdiv(num_row_tiles, 2)            # split row tiles over 2 TCs (v7x)
    needs_mask = (2 * inner * tile_f) != rows_f  # partial / duplicated last block

    feat_spec = pl.BlockSpec((tile_f, lanes_f), _feat_index_map(inner, num_row_tiles))
    acc_spec = pl.BlockSpec((8, lanes_f), lambda c, i: (c, 0))
    acc_shape = jax.ShapeDtypeStruct((2 * 8, lanes_f), jnp.float32)

    s1, q1, s2, q2 = pl.pallas_call(
        _make_moments_kernel(rows_f, tile_f, inner, needs_mask),
        grid=(2, inner),
        in_specs=[feat_spec, feat_spec],
        out_specs=(acc_spec, acc_spec, acc_spec, acc_spec),
        out_shape=(acc_shape, acc_shape, acc_shape, acc_shape),
        compiler_params=pltpu.CompilerParams(
            dimension_semantics=("parallel", "arbitrary"),
            vmem_limit_bytes=_VMEM_LIMIT_BYTES),
        cost_estimate=pl.CostEstimate(
            flops=6 * n,
            transcendentals=0,
            bytes_accessed=2 * n * feature1.dtype.itemsize),
    )(f1_2d, f2_2d)

    # -------- tiny scalar finalize (plain JAX) --------
    nf = jnp.float32(n)
    s1t, q1t = jnp.sum(s1), jnp.sum(q1)
    s2t, q2t = jnp.sum(s2), jnp.sum(q2)
    # Unbiased variance from single-pass sums; clamp >=0 against cancellation.
    v1 = jnp.maximum((q1t - s1t * s1t / nf) / (nf - 1.0), 0.0)
    v2 = jnp.maximum((q2t - s2t * s2t / nf) / (nf - 1.0), 0.0)
    a1 = (v1 / (v1 + v2)).reshape(1, 1).astype(jnp.float32)

    # -------- pass 2: weighted elementwise combine --------
    m = z1.size
    lanes_z, rows_z, tile_z, padded_z = _layout(m, z1.dtype)
    z1_2d = _to_2d(z1, lanes_z, padded_z)
    z2_2d = _to_2d(z2, lanes_z, padded_z)

    z_spec = pl.BlockSpec((tile_z, lanes_z), lambda i: (i, 0))
    out_2d = pl.pallas_call(
        _combine_kernel,
        grid=(pl.cdiv(rows_z, tile_z),),
        in_specs=[pl.BlockSpec(memory_space=pltpu.MemorySpace.SMEM),
                  z_spec, z_spec],
        out_specs=z_spec,
        out_shape=jax.ShapeDtypeStruct((rows_z, lanes_z), z1.dtype),
        compiler_params=pltpu.CompilerParams(
            dimension_semantics=("parallel",),
            vmem_limit_bytes=_VMEM_LIMIT_BYTES),
        cost_estimate=pl.CostEstimate(
            flops=3 * m,
            transcendentals=0,
            bytes_accessed=3 * m * z1.dtype.itemsize),
    )(a1, z1_2d, z2_2d)

    out_flat = out_2d.reshape(-1)
    if padded_z != m:                 # only the unaligned fallback pays a slice
        out_flat = out_flat[:m]
    return out_flat.reshape(z1.shape)


def _fuse_ref(feature1, feature2, z1, z2):
    w1 = jnp.var(feature1, ddof=1)
    w2 = jnp.var(feature2, ddof=1)
    a1 = w1 / (w1 + w2)
    return z1 * a1 + z2 * (1.0 - a1)


if __name__ == "__main__":
    key = jax.random.PRNGKey(0)
    k1, k2, k3, k4 = jax.random.split(key, 4)

    B, C, H, W = 2, 4, 16, 16
    feature1 = jax.random.normal(k1, (B, C, H, W), dtype=jnp.float32)
    feature2 = jax.random.normal(k2, (B, C, H, W), dtype=jnp.float32) * 2.0
    z1 = jax.random.normal(k3, (B, C, H, W), dtype=jnp.float32)
    z2 = jax.random.normal(k4, (B, C, H, W), dtype=jnp.float32)

    out = fuse(feature1, feature2, z1, z2)
    jax.block_until_ready(out)

    ref = _fuse_ref(feature1, feature2, z1, z2)
    assert out.shape == ref.shape
    assert jnp.allclose(out, ref, atol=1e-4, rtol=1e-4), "mismatch vs reference"

    print("KERNEL_OK")
</pallas_src>

<mosaic_0001>
module attributes {stable_mosaic.version = 11 : i64} {
  func.func @kernel(%arg0: i32, %arg1: i32, %arg2: memref<8x256xf32, #tpu.memory_space<vmem>>, %arg3: memref<8x256xf32, #tpu.memory_space<vmem>>, %arg4: memref<8x256xf32, #tpu.memory_space<vmem>>, %arg5: memref<8x256xf32, #tpu.memory_space<vmem>>, %arg6: memref<8x256xf32, #tpu.memory_space<vmem>>, %arg7: memref<8x256xf32, #tpu.memory_space<vmem>>) attributes {dimension_semantics = [#tpu.dimension_semantics<parallel>, #tpu.dimension_semantics<arbitrary>], iteration_bounds = array<i64: 2, 1>, scalar_prefetch = 0 : i64, scratch_operands = 0 : i64, tpu.core_type = #tpu.core_type<tc>, window_params = [{transform_indices = @transform_0, window_bounds = array<i64: 8, 256>}, {transform_indices = @transform_1, window_bounds = array<i64: 8, 256>}, {transform_indices = @transform_2, window_bounds = array<i64: 8, 256>}, {transform_indices = @transform_3, window_bounds = array<i64: 8, 256>}, {transform_indices = @transform_4, window_bounds = array<i64: 8, 256>}, {transform_indices = @transform_5, window_bounds = array<i64: 8, 256>}]} {
    %c0_i32 = arith.constant 0 : i32
    %0 = arith.cmpi eq, %arg1, %c0_i32 : i32
    %1 = arith.extui %0 : i1 to i32
    %c0_i32_0 = arith.constant 0 : i32
    %2 = arith.cmpi ne, %1, %c0_i32_0 : i32
    scf.if %2 {
      %cst_26 = arith.constant 0.000000e+00 : f32
      %41 = vector.broadcast %cst_26 : f32 to vector<8x256xf32>
      %c0_27 = arith.constant 0 : index
      %c0_28 = arith.constant 0 : index
      %42 = vector.load %arg4[%c0_27, %c0_28] : memref<8x256xf32, #tpu.memory_space<vmem>>, vector<8x256xf32>
      tpu.vector_store %arg4[%c0_27, %c0_28], %41 {strides = array<i32>} : memref<8x256xf32, #tpu.memory_space<vmem>>, vector<8x256xf32>,
      %cst_29 = arith.constant 0.000000e+00 : f32
      %43 = vector.broadcast %cst_29 : f32 to vector<8x256xf32>
      %c0_30 = arith.constant 0 : index
      %c0_31 = arith.constant 0 : index
      %44 = vector.load %arg5[%c0_30, %c0_31] : memref<8x256xf32, #tpu.memory_space<vmem>>, vector<8x256xf32>
      tpu.vector_store %arg5[%c0_30, %c0_31], %43 {strides = array<i32>} : memref<8x256xf32, #tpu.memory_space<vmem>>, vector<8x256xf32>,
      %cst_32 = arith.constant 0.000000e+00 : f32
      %45 = vector.broadcast %cst_32 : f32 to vector<8x256xf32>
      %c0_33 = arith.constant 0 : index
      %c0_34 = arith.constant 0 : index
      %46 = vector.load %arg6[%c0_33, %c0_34] : memref<8x256xf32, #tpu.memory_space<vmem>>, vector<8x256xf32>
      tpu.vector_store %arg6[%c0_33, %c0_34], %45 {strides = array<i32>} : memref<8x256xf32, #tpu.memory_space<vmem>>, vector<8x256xf32>,
      %cst_35 = arith.constant 0.000000e+00 : f32
      %47 = vector.broadcast %cst_35 : f32 to vector<8x256xf32>
      %c0_36 = arith.constant 0 : index
      %c0_37 = arith.constant 0 : index
      %48 = vector.load %arg7[%c0_36, %c0_37] : memref<8x256xf32, #tpu.memory_space<vmem>>, vector<8x256xf32>
      tpu.vector_store %arg7[%c0_36, %c0_37], %47 {strides = array<i32>} : memref<8x256xf32, #tpu.memory_space<vmem>>, vector<8x256xf32>,
    } else {
    }
    %c0 = arith.constant 0 : index
    %c0_1 = arith.constant 0 : index
    %3 = vector.load %arg2[%c0, %c0_1] : memref<8x256xf32, #tpu.memory_space<vmem>>, vector<8x256xf32>
    %c0_2 = arith.constant 0 : index
    %c0_3 = arith.constant 0 : index
    %4 = vector.load %arg3[%c0_2, %c0_3] : memref<8x256xf32, #tpu.memory_space<vmem>>, vector<8x256xf32>
    %c1_i32 = arith.constant 1 : i32
    %5 = arith.muli %arg0, %c1_i32 : i32
    %6 = arith.addi %5, %arg1 : i32
    %c8_i32 = arith.constant 8 : i32
    %7 = arith.muli %6, %c8_i32 : i32
    %8 = tpu.iota {dimensions = array<i32: 0>} : vector<8x1xi32>
    %9 = vector.broadcast %7 : i32 to vector<8x1xi32>
    %10 = arith.addi %8, %9 : vector<8x1xi32>
    %c8_i32_4 = arith.constant 8 : i32
    %11 = vector.broadcast %c8_i32_4 : i32 to vector<8x1xi32>
    %12 = arith.cmpi slt, %10, %11 : vector<8x1xi32>
    %cst = arith.constant 0.000000e+00 : f32
    %13 = vector.shape_cast %12 : vector<8x1xi1> to vector<8x1xi1>
    %14 = vector.broadcast %13 : vector<8x1xi1> to vector<8x256xi1>
    %15 = vector.broadcast %cst : f32 to vector<8x256xf32>
    %16 = arith.select %14, %3, %15 : vector<8x256xi1>, vector<8x256xf32>
    %cst_5 = arith.constant 0.000000e+00 : f32
    %17 = vector.shape_cast %12 : vector<8x1xi1> to vector<8x1xi1>
    %18 = vector.broadcast %17 : vector<8x1xi1> to vector<8x256xi1>
    %19 = vector.broadcast %cst_5 : f32 to vector<8x256xf32>
    %20 = arith.select %18, %4, %19 : vector<8x256xi1>, vector<8x256xf32>
    %21 = vector.shape_cast %16 : vector<8x256xf32> to vector<1x8x256xf32>
    %22 = vector.shape_cast %20 : vector<8x256xf32> to vector<1x8x256xf32>
    %c0_6 = arith.constant 0 : index
    %c0_7 = arith.constant 0 : index
    %23 = vector.load %arg4[%c0_6, %c0_7] : memref<8x256xf32, #tpu.memory_space<vmem>>, vector<8x256xf32>
    %cst_8 = arith.constant dense<0.000000e+00> : vector<8x256xf32>
    %24 = vector.multi_reduction <add>, %21, %cst_8 [0] : vector<1x8x256xf32> to vector<8x256xf32>
    %25 = arith.addf %23, %24 : vector<8x256xf32>
    %c0_9 = arith.constant 0 : index
    %c0_10 = arith.constant 0 : index
    %26 = vector.load %arg4[%c0_9, %c0_10] : memref<8x256xf32, #tpu.memory_space<vmem>>, vector<8x256xf32>
    tpu.vector_store %arg4[%c0_9, %c0_10], %25 {strides = array<i32>} : memref<8x256xf32, #tpu.memory_space<vmem>>, vector<8x256xf32>,
    %c0_11 = arith.constant 0 : index
    %c0_12 = arith.constant 0 : index
    %27 = vector.load %arg5[%c0_11, %c0_12] : memref<8x256xf32, #tpu.memory_space<vmem>>, vector<8x256xf32>
    %28 = arith.mulf %21, %21 : vector<1x8x256xf32>
    %cst_13 = arith.constant dense<0.000000e+00> : vector<8x256xf32>
    %29 = vector.multi_reduction <add>, %28, %cst_13 [0] : vector<1x8x256xf32> to vector<8x256xf32>
    %30 = arith.addf %27, %29 : vector<8x256xf32>
    %c0_14 = arith.constant 0 : index
    %c0_15 = arith.constant 0 : index
    %31 = vector.load %arg5[%c0_14, %c0_15] : memref<8x256xf32, #tpu.memory_space<vmem>>, vector<8x256xf32>
    tpu.vector_store %arg5[%c0_14, %c0_15], %30 {strides = array<i32>} : memref<8x256xf32, #tpu.memory_space<vmem>>, vector<8x256xf32>,
    %c0_16 = arith.constant 0 : index
    %c0_17 = arith.constant 0 : index
    %32 = vector.load %arg6[%c0_16, %c0_17] : memref<8x256xf32, #tpu.memory_space<vmem>>, vector<8x256xf32>
    %cst_18 = arith.constant dense<0.000000e+00> : vector<8x256xf32>
    %33 = vector.multi_reduction <add>, %22, %cst_18 [0] : vector<1x8x256xf32> to vector<8x256xf32>
    %34 = arith.addf %32, %33 : vector<8x256xf32>
    %c0_19 = arith.constant 0 : index
    %c0_20 = arith.constant 0 : index
    %35 = vector.load %arg6[%c0_19, %c0_20] : memref<8x256xf32, #tpu.memory_space<vmem>>, vector<8x256xf32>
    tpu.vector_store %arg6[%c0_19, %c0_20], %34 {strides = array<i32>} : memref<8x256xf32, #tpu.memory_space<vmem>>, vector<8x256xf32>,
    %c0_21 = arith.constant 0 : index
    %c0_22 = arith.constant 0 : index
    %36 = vector.load %arg7[%c0_21, %c0_22] : memref<8x256xf32, #tpu.memory_space<vmem>>, vector<8x256xf32>
    %37 = arith.mulf %22, %22 : vector<1x8x256xf32>
    %cst_23 = arith.constant dense<0.000000e+00> : vector<8x256xf32>
    %38 = vector.multi_reduction <add>, %37, %cst_23 [0] : vector<1x8x256xf32> to vector<8x256xf32>
    %39 = arith.addf %36, %38 : vector<8x256xf32>
    %c0_24 = arith.constant 0 : index
    %c0_25 = arith.constant 0 : index
    %40 = vector.load %arg7[%c0_24, %c0_25] : memref<8x256xf32, #tpu.memory_space<vmem>>, vector<8x256xf32>
    tpu.vector_store %arg7[%c0_24, %c0_25], %39 {strides = array<i32>} : memref<8x256xf32, #tpu.memory_space<vmem>>, vector<8x256xf32>,
    return
  }
  func.func @transform_0(%arg0: i32, %arg1: i32) -> (i32, i32) {
    %c1_i32 = arith.constant 1 : i32
    %0 = arith.muli %arg0, %c1_i32 : i32
    %1 = arith.addi %0, %arg1 : i32
    %c0_i32 = arith.constant 0 : i32
    %2 = arith.minsi %1, %c0_i32 : i32
    %c0_i32_0 = arith.constant 0 : i32
    %c0_i32_1 = arith.constant 0 : i32
    return %2, %c0_i32_0 : i32, i32
  }
  func.func @transform_1(%arg0: i32, %arg1: i32) -> (i32, i32) {
    %c1_i32 = arith.constant 1 : i32
    %0 = arith.muli %arg0, %c1_i32 : i32
    %1 = arith.addi %0, %arg1 : i32
    %c0_i32 = arith.constant 0 : i32
    %2 = arith.minsi %1, %c0_i32 : i32
    %c0_i32_0 = arith.constant 0 : i32
    %c0_i32_1 = arith.constant 0 : i32
    return %2, %c0_i32_0 : i32, i32
  }
  func.func @transform_2(%arg0: i32, %arg1: i32) -> (i32, i32) {
    %c0_i32 = arith.constant 0 : i32
    %c0_i32_0 = arith.constant 0 : i32
    return %arg0, %c0_i32 : i32, i32
  }
  func.func @transform_3(%arg0: i32, %arg1: i32) -> (i32, i32) {
    %c0_i32 = arith.constant 0 : i32
    %c0_i32_0 = arith.constant 0 : i32
    return %arg0, %c0_i32 : i32, i32
  }
  func.func @transform_4(%arg0: i32, %arg1: i32) -> (i32, i32) {
    %c0_i32 = arith.constant 0 : i32
    %c0_i32_0 = arith.constant 0 : i32
    return %arg0, %c0_i32 : i32, i32
  }
  func.func @transform_5(%arg0: i32, %arg1: i32) -> (i32, i32) {
    %c0_i32 = arith.constant 0 : i32
    %c0_i32_0 = arith.constant 0 : i32
    return %arg0, %c0_i32 : i32, i32
  }
}

module attributes {stable_mosaic.version = 11 : i64} {
  func.func @_combine_kernel(%arg0: i32, %arg1: memref<1x1xf32, #tpu.memory_space<smem>>, %arg2: memref<8x256xf32, #tpu.memory_space<vmem>>, %arg3: memref<8x256xf32, #tpu.memory_space<vmem>>, %arg4: memref<8x256xf32, #tpu.memory_space<vmem>>) attributes {dimension_semantics = [#tpu.dimension_semantics<parallel>], iteration_bounds = array<i64: 1>, scalar_prefetch = 0 : i64, scratch_operands = 0 : i64, tpu.core_type = #tpu.core_type<tc>, window_params = [{transform_indices = @transform_0, window_bounds = array<i64: 1, 1>}, {transform_indices = @transform_1, window_bounds = array<i64: 8, 256>}, {transform_indices = @transform_2, window_bounds = array<i64: 8, 256>}, {transform_indices = @transform_3, window_bounds = array<i64: 8, 256>}]} {
    %c0 = arith.constant 0 : index
    %c0_0 = arith.constant 0 : index
    %0 = memref.load %arg1[%c0, %c0_0] : memref<1x1xf32, #tpu.memory_space<smem>>
    %cst = arith.constant 1.000000e+00 : f32
    %1 = arith.subf %cst, %0 : f32
    %c0_1 = arith.constant 0 : index
    %c0_2 = arith.constant 0 : index
    %2 = vector.load %arg2[%c0_1, %c0_2] : memref<8x256xf32, #tpu.memory_space<vmem>>, vector<8x256xf32>
    %3 = vector.broadcast %0 : f32 to vector<8x256xf32>
    %4 = arith.mulf %2, %3 : vector<8x256xf32>
    %c0_3 = arith.constant 0 : index
    %c0_4 = arith.constant 0 : index
    %5 = vector.load %arg3[%c0_3, %c0_4] : memref<8x256xf32, #tpu.memory_space<vmem>>, vector<8x256xf32>
    %6 = vector.broadcast %1 : f32 to vector<8x256xf32>
    %7 = arith.mulf %5, %6 : vector<8x256xf32>
    %8 = arith.addf %4, %7 : vector<8x256xf32>
    %c0_5 = arith.constant 0 : index
    %c0_6 = arith.constant 0 : index
    %9 = vector.load %arg4[%c0_5, %c0_6] : memref<8x256xf32, #tpu.memory_space<vmem>>, vector<8x256xf32>
    tpu.vector_store %arg4[%c0_5, %c0_6], %8 {strides = array<i32>} : memref<8x256xf32, #tpu.memory_space<vmem>>, vector<8x256xf32>,
    return
  }
  func.func @transform_0(%arg0: i32) -> (i32, i32) {
    %c0_i32 = arith.constant 0 : i32
    %c0_i32_0 = arith.constant 0 : i32
    %c0_i32_1 = arith.constant 0 : i32
    return %c0_i32, %c0_i32_0 : i32, i32
  }
  func.func @transform_1(%arg0: i32) -> (i32, i32) {
    %c0_i32 = arith.constant 0 : i32
    %c0_i32_0 = arith.constant 0 : i32
    return %arg0, %c0_i32 : i32, i32
  }
  func.func @transform_2(%arg0: i32) -> (i32, i32) {
    %c0_i32 = arith.constant 0 : i32
    %c0_i32_0 = arith.constant 0 : i32
    return %arg0, %c0_i32 : i32, i32
  }
  func.func @transform_3(%arg0: i32) -> (i32, i32) {
    %c0_i32 = arith.constant 0 : i32
    %c0_i32_0 = arith.constant 0 : i32
    return %arg0, %c0_i32 : i32, i32
  }
}

</mosaic_0001>

<llo_original>
// kernel: fuse.2
$region0: #{fuse.2}
  #allocation0 [shape = 'u32[]', space=smem, size = 0x4, offset = 0x4, fixed_abs, tag = 'smem constant byte address 0x4 - core index']
  #allocation1 [shape = 'u32[144,128]{1,0:T(1,128)}', space=vmem, size = 0x12000, scoped, tag = 'internal scratch']
  %s0 = inlined_call_operand.vmem [shape: f32[8,256], index: 0, kind: input, shape index: {}]
  %s1 = inlined_call_operand.vmem [shape: f32[8,256], index: 1, kind: input, shape index: {}]
  %s2 = inlined_call_operand.vmem [shape: f32[16,256], index: 2, kind: output, shape index: {0}]
  %s3 = inlined_call_operand.vmem [shape: f32[16,256], index: 3, kind: output, shape index: {1}]
  %s4 = inlined_call_operand.vmem [shape: f32[16,256], index: 4, kind: output, shape index: {2}]
  %s5 = inlined_call_operand.vmem [shape: f32[16,256], index: 5, kind: output, shape index: {3}]
  %6 = xla_tuple %s2, %s3, %s4, %s5
  %s7 = sld [smem:[#allocation0]]
  $region69: #{fuse.2} parent=0
    _
  %s9 = ssub.s32 1, %s7
  %s10 = scalar_select 0, %s9, %s7
  loop: start=0, step=1, limit=4
  $region2: #{fuse.2} parent=0 // loop_pre_header
    _
  $region3: #{fuse.2} parent=0 // loop_header
    %s12 = sphi 0, %s16
    %p13 = scmp.ge.s32.totalorder %s12, 4
    %s19 = sphi 0, %s31
    %s20 = sphi 0, %s27
    %s21 = sphi 0, %s19
    %s22 = sphi 0, %s20
    %s23 = sphi 0, %s21
    %s24 = sphi 0, %s22
    %s40 = sphi 0, %s42
    %s43 = sphi 0, %s40
    %s44 = sphi 0, %s43
    %s60 = sphi 0, %s44
    %s72 = sphi 0, %s74
    %s75 = sphi 0, %s72
    %s76 = sphi 0, %s75
    %s92 = sphi 0, %s76
    %s98 = sphi 0, %s100
    %s101 = sphi 0, %s98
    %s102 = sphi 0, %s101
    %s118 = sphi 0, %s102
    %s124 = sphi 0, %s126
    %s127 = sphi 0, %s124
    %s128 = sphi 0, %s127
    %s144 = sphi 0, %s128
    %s150 = sphi 0, %s152
    %s153 = sphi 0, %s150
    %s154 = sphi 0, %s153
    %s170 = sphi 0, %s154
    %s176 = sphi 0, %s178
    %s179 = sphi 0, %s176
    %s180 = sphi 0, %s179
    %s196 = sphi 0, %s180
  $region4: #{fuse.2} parent=0 // loop_header_branch
    %15 = sbr.rel (%p13) target = $region8
  $region5: #{fuse.2} parent=0 // loop_body
    %s17 = ssub.s32 %s12, 1
    %s18 = ssub.s32 %s12, 2
    %s25 = sadd.s32 1, %s20
    %p26 = scmp.ge.s32.totalorder %s25, 1
    %s27 = scalar_select %p26, 0, %s25
    %s28 = sadd.s32 1, %s19
    %s29 = scalar_select %p26, %s28, %s19
    %p30 = scmp.ge.s32.totalorder %s29, 2
    %s31 = scalar_select %p30, 0, %s29
    %s32 = sadd.s32 %s19, %s20
    %p33 = scmp.lt.s32.totalorder %s32, 0
    %s34 = scalar_select %p33, %s32, 0
    %s35 = sadd.s32 %s31, %s27
    %p36 = scmp.lt.s32.totalorder %s35, 0
    %s37 = scalar_select %p36, %s35, 0
    %s38 = ssub.s32 %s34, %s37
    %p39 = scmp.eq.s32.totalorder %s38, 0
    %s41 = sadd.s32 %s40, 1
    %s42 = scalar_select %p39, %s40, %s41
    %p45 = pneg %p39
    %p46 = scmp.eq.s32.totalorder %s12, 1
    %p47 = por %p45, %p46
    %p48 = scmp.ne.s32.totalorder %s40, %s43
    %p49 = scmp.eq.s32.totalorder %s12, 0
    %p50 = por %p48, %p49
    %p51 = scmp.ne.s32.totalorder %s40, %s43
    %p52 = scmp.eq.s32.totalorder %s17, 1
    %p53 = por %p51, %p52
    %p54 = scmp.ne.s32.totalorder %s43, %s44
    %p55 = scmp.eq.s32.totalorder %s17, 0
    %p56 = por %p54, %p55
    %p57 = scmp.ne.s32.totalorder %s43, %s44
    %p58 = scmp.eq.s32.totalorder %s18, 1
    %p59 = por %p57, %p58
    %p61 = scmp.ne.s32.totalorder %s44, %s60
    %p62 = scmp.eq.s32.totalorder %s18, 0
    %p63 = por %p61, %p62
    %s64 = sadd.s32 %s19, %s20
    %p65 = scmp.lt.s32.totalorder %s64, 0
    %s66 = scalar_select %p65, %s64, 0
    %s67 = sadd.s32 %s31, %s27
    %p68 = scmp.lt.s32.totalorder %s67, 0
    %s69 = scalar_select %p68, %s67, 0
    %s70 = ssub.s32 %s66, %s69
    %p71 = scmp.eq.s32.totalorder %s70, 0
    %s73 = sadd.s32 %s72, 1
    %s74 = scalar_select %p71, %s72, %s73
    %p77 = pneg %p71
    %p78 = scmp.eq.s32.totalorder %s12, 1
    %p79 = por %p77, %p78
    %p80 = scmp.ne.s32.totalorder %s72, %s75
    %p81 = scmp.eq.s32.totalorder %s12, 0
    %p82 = por %p80, %p81
    %p83 = scmp.ne.s32.totalorder %s72, %s75
    %p84 = scmp.eq.s32.totalorder %s17, 1
    %p85 = por %p83, %p84
    %p86 = scmp.ne.s32.totalorder %s75, %s76
    %p87 = scmp.eq.s32.totalorder %s17, 0
    %p88 = por %p86, %p87
    %p89 = scmp.ne.s32.totalorder %s75, %s76
    %p90 = scmp.eq.s32.totalorder %s18, 1
    %p91 = por %p89, %p90
    %p93 = scmp.ne.s32.totalorder %s76, %s92
    %p94 = scmp.eq.s32.totalorder %s18, 0
    %p95 = por %p93, %p94
    %s96 = ssub.s32 %s19, %s31
    %p97 = scmp.eq.s32.totalorder %s96, 0
    %s99 = sadd.s32 %s98, 1
    %s100 = scalar_select %p97, %s98, %s99
    %p103 = pneg %p97
    %p104 = scmp.eq.s32.totalorder %s12, 1
    %p105 = por %p103, %p104
    %p106 = scmp.ne.s32.totalorder %s98, %s101
    %p107 = scmp.eq.s32.totalorder %s12, 0
    %p108 = por %p106, %p107
    %p109 = scmp.ne.s32.totalorder %s98, %s101
    %p110 = scmp.eq.s32.totalorder %s17, 1
    %p111 = por %p109, %p110
    %p112 = scmp.ne.s32.totalorder %s101, %s102
    %p113 = scmp.eq.s32.totalorder %s17, 0
    %p114 = por %p112, %p113
    %p115 = scmp.ne.s32.totalorder %s101, %s102
    %p116 = scmp.eq.s32.totalorder %s18, 1
    %p117 = por %p115, %p116
    %p119 = scmp.ne.s32.totalorder %s102, %s118
    %p120 = scmp.eq.s32.totalorder %s18, 0
    %p121 = por %p119, %p120
    %s122 = ssub.s32 %s19, %s31
    %p123 = scmp.eq.s32.totalorder %s122, 0
    %s125 = sadd.s32 %s124, 1
    %s126 = scalar_select %p123, %s124, %s125
    %p129 = pneg %p123
    %p130 = scmp.eq.s32.totalorder %s12, 1
    %p131 = por %p129, %p130
    %p132 = scmp.ne.s32.totalorder %s124, %s127
    %p133 = scmp.eq.s32.totalorder %s12, 0
    %p134 = por %p132, %p133
    %p135 = scmp.ne.s32.totalorder %s124, %s127
    %p136 = scmp.eq.s32.totalorder %s17, 1
    %p137 = por %p135, %p136
    %p138 = scmp.ne.s32.totalorder %s127, %s128
    %p139 = scmp.eq.s32.totalorder %s17, 0
    %p140 = por %p138, %p139
    %p141 = scmp.ne.s32.totalorder %s127, %s128
    %p142 = scmp.eq.s32.totalorder %s18, 1
    %p143 = por %p141, %p142
    %p145 = scmp.ne.s32.totalorder %s128, %s144
    %p146 = scmp.eq.s32.totalorder %s18, 0
    %p147 = por %p145, %p146
    %s148 = ssub.s32 %s19, %s31
    %p149 = scmp.eq.s32.totalorder %s148, 0
    %s151 = sadd.s32 %s150, 1
    %s152 = scalar_select %p149, %s150, %s151
    %p155 = pneg %p149
    %p156 = scmp.eq.s32.totalorder %s12, 1
    %p157 = por %p155, %p156
    %p158 = scmp.ne.s32.totalorder %s150, %s153
    %p159 = scmp.eq.s32.totalorder %s12, 0
    %p160 = por %p158, %p159
    %p161 = scmp.ne.s32.totalorder %s150, %s153
    %p162 = scmp.eq.s32.totalorder %s17, 1
    %p163 = por %p161, %p162
    %p164 = scmp.ne.s32.totalorder %s153, %s154
    %p165 = scmp.eq.s32.totalorder %s17, 0
    %p166 = por %p164, %p165
    %p167 = scmp.ne.s32.totalorder %s153, %s154
    %p168 = scmp.eq.s32.totalorder %s18, 1
    %p169 = por %p167, %p168
    %p171 = scmp.ne.s32.totalorder %s154, %s170
    %p172 = scmp.eq.s32.totalorder %s18, 0
    %p173 = por %p171, %p172
    %s174 = ssub.s32 %s19, %s31
    %p175 = scmp.eq.s32.totalorder %s174, 0
    %s177 = sadd.s32 %s176, 1
    %s178 = scalar_select %p175, %s176, %s177
    %p181 = pneg %p175
    %p182 = scmp.eq.s32.totalorder %s12, 1
    %p183 = por %p181, %p182
    %p184 = scmp.ne.s32.totalorder %s176, %s179
    %p185 = scmp.eq.s32.totalorder %s12, 0
    %p186 = por %p184, %p185
    %p187 = scmp.ne.s32.totalorder %s176, %s179
    %p188 = scmp.eq.s32.totalorder %s17, 1
    %p189 = por %p187, %p188
    %p190 = scmp.ne.s32.totalorder %s179, %s180
    %p191 = scmp.eq.s32.totalorder %s17, 0
    %p192 = por %p190, %p191
    %p193 = scmp.ne.s32.totalorder %s179, %s180
    %p194 = scmp.eq.s32.totalorder %s18, 1
    %p195 = por %p193, %p194
    %p197 = scmp.ne.s32.totalorder %s180, %s196
    %p198 = scmp.eq.s32.totalorder %s18, 0
    %p199 = por %p197, %p198
    %p200 = scmp.le.s32.totalorder 1, %s12
    %p201 = scmp.lt.s32.totalorder %s12, 3
    %p202 = pnand %p200, %p201
    %p203 = pneg %p202
    // Predicated region
    $region9: #{fuse.2} parent=5 // pred_check
      _
    $region10: #{fuse.2} parent=5 // pred_check_branch
      %205 = sbr.rel (%p202) target = $region12
    $region11: #{fuse.2} parent=5 // pred_region
      %s206 = ssub.s32 %s12, 1
    $region12: #{fuse.2} parent=5 // pred_fallthru
      _
    %p207 = scmp.lt.s32.totalorder %s12, 2
    // Predicated region
    $region13: #{fuse.2} parent=5 // pred_check
      %p208 = pneg %p207
    $region14: #{fuse.2} parent=5 // pred_check_branch
      %210 = sbr.rel (%p208) target = $region16
    $region15: #{fuse.2} parent=5 // pred_region
      // Predicated region
      $region17: #{fuse.2} parent=15 // pred_check
        %p211 = pneg %p50
      $region18: #{fuse.2} parent=15 // pred_check_branch
        %213 = sbr.rel (%p211) target = $region20
      $region19: #{fuse.2} parent=15 // pred_region
        %s214 = sadd.s32 %s19, %s20
        %p215 = scmp.lt.s32.totalorder %s214, 0
        %s216 = scalar_select %p215, %s214, 0
        %p217 = scmp.lt.s32.totalorder %s216, 0
        %s218 = scalar_select %p217, %s216, 0
        %s219 = smul.addr %s218, 2
        %s220 = smul.addr %s219, 8
        %s221 = scalar_lea.vmem %s0, %s220
        %s222 = sadd.s32 %s19, %s20
        %p223 = scmp.lt.s32.totalorder %s222, 0
        %s224 = scalar_select %p223, %s222, 0
      $region20: #{fuse.2} parent=15 // pred_fallthru
        _
      // Predicated region
      $region21: #{fuse.2} parent=15 // pred_check
        %p225 = pneg %p82
      $region22: #{fuse.2} parent=15 // pred_check_branch
        %227 = sbr.rel (%p225) target = $region24
      $region23: #{fuse.2} parent=15 // pred_region
        %s228 = sadd.s32 %s19, %s20
        %p229 = scmp.lt.s32.totalorder %s228, 0
        %s230 = scalar_select %p229, %s228, 0
        %p231 = scmp.lt.s32.totalorder %s230, 0
        %s232 = scalar_select %p231, %s230, 0
        %s233 = smul.addr %s232, 2
        %s234 = smul.addr %s233, 8
        %s235 = scalar_lea.vmem %s1, %s234
        %s236 = sadd.s32 %s19, %s20
        %p237 = scmp.lt.s32.totalorder %s236, 0
        %s238 = scalar_select %p237, %s236, 0
      $region24: #{fuse.2} parent=15 // pred_fallthru
        _
    $region16: #{fuse.2} parent=5 // pred_fallthru
      _
    %p239 = scmp.le.s32.totalorder 1, %s12
    %p240 = scmp.lt.s32.totalorder %s12, 3
    %p241 = pnand %p239, %p240
    %p242 = pneg %p241
    // Predicated region
    $region25: #{fuse.2} parent=5 // pred_check
      _
    $region26: #{fuse.2} parent=5 // pred_check_branch
      %244 = sbr.rel (%p241) target = $region28
    $region27: #{fuse.2} parent=5 // pred_region
      %s245 = ssub.s32 %s12, 1
      %s246 = sadd.s32 %s21, %s22
      %p247 = scmp.lt.s32.totalorder %s246, 0
      %s248 = scalar_select %p247, %s246, 0
      %p249 = scmp.lt.s32.totalorder %s248, 0
      %s250 = scalar_select %p249, %s248, 0
      %s251 = smul.addr %s250, 2
      %s252 = smul.addr %s251, 8
      %s253 = scalar_lea.vmem %s0, %s252
      %p254 = pneg %p56
      %p255 = pneg %p53
      %s256 = sadd.s32 %s21, %s22
      %p257 = scmp.lt.s32.totalorder %s256, 0
      %s258 = scalar_select %p257, %s256, 0
      %p259 = scmp.lt.s32.totalorder %s258, 0
      %s260 = scalar_select %p259, %s258, 0
      %s261 = smul.addr %s260, 2
      %s262 = smul.addr %s261, 8
      %s263 = scalar_lea.vmem %s1, %s262
      %p264 = pneg %p88
      %p265 = pneg %p85
      %p266 = pneg %p114
      %p267 = pneg %p111
      %p268 = scmp.lt.s32.totalorder %s21, 1
      %s269 = scalar_select %p268, %s21, 1
      %s270 = smul.addr %s269, 2
      %s271 = smul.addr %s270, 8
      %s272 = scalar_lea.vmem %s2, %s271
      %p273 = pneg %p140
      %p274 = pneg %p137
      %p275 = scmp.lt.s32.totalorder %s21, 1
      %s276 = scalar_select %p275, %s21, 1
      %s277 = smul.addr %s276, 2
      %s278 = smul.addr %s277, 8
      %s279 = scalar_lea.vmem %s3, %s278
      %p280 = pneg %p166
      %p281 = pneg %p163
      %p282 = scmp.lt.s32.totalorder %s21, 1
      %s283 = scalar_select %p282, %s21, 1
      %s284 = smul.addr %s283, 2
      %s285 = smul.addr %s284, 8
      %s286 = scalar_lea.vmem %s4, %s285
      %p287 = pneg %p192
      %p288 = pneg %p189
      %p289 = scmp.lt.s32.totalorder %s21, 1
      %s290 = scalar_select %p289, %s21, 1
      %s291 = smul.addr %s290, 2
      %s292 = smul.addr %s291, 8
      %s293 = scalar_lea.vmem %s5, %s292
      %s294 = sadd.s32 %s21, %s22
      %p295 = scmp.lt.s32.totalorder %s294, 0
      %s296 = scalar_select %p295, %s294, 0
      %p297 = scmp.lt.s32.totalorder %s296, 0
      %s298 = scalar_select %p297, %s296, 0
      %s299 = smul.addr %s298, 2
      %s300 = smul.addr %s299, 8
      %s301 = scalar_lea.vmem %s0, %s300
      %s302 = sadd.s32 %s21, %s22
      %p303 = scmp.lt.s32.totalorder %s302, 0
      %s304 = scalar_select %p303, %s302, 0
      %s305 = sadd.s32 %s21, %s22
      %p306 = scmp.lt.s32.totalorder %s305, 0
      %s307 = scalar_select %p306, %s305, 0
      %p308 = scmp.lt.s32.totalorder %s307, 0
      %s309 = scalar_select %p308, %s307, 0
      %s310 = smul.addr %s309, 2
      %s311 = smul.addr %s310, 8
      %s312 = scalar_lea.vmem %s1, %s311
      %s313 = sadd.s32 %s21, %s22
      %p314 = scmp.lt.s32.totalorder %s313, 0
      %s315 = scalar_select %p314, %s313, 0
      %p316 = scmp.lt.s32.totalorder %s21, 1
      %s317 = scalar_select %p316, %s21, 1
      %s318 = smul.addr %s317, 2
      %s319 = smul.addr %s318, 8
      %s320 = scalar_lea.vmem %s2, %s319
      %p321 = scmp.lt.s32.totalorder %s21, 1
      %s322 = scalar_select %p321, %s21, 1
      %s323 = smul.addr %s322, 2
      %s324 = smul.addr %s323, 8
      %s325 = scalar_lea.vmem %s3, %s324
      %p326 = scmp.lt.s32.totalorder %s21, 1
      %s327 = scalar_select %p326, %s21, 1
      %s328 = smul.addr %s327, 2
      %s329 = smul.addr %s328, 8
      %s330 = scalar_lea.vmem %s4, %s329
      %p331 = scmp.lt.s32.totalorder %s21, 1
      %s332 = scalar_select %p331, %s21, 1
      %s333 = smul.addr %s332, 2
      %s334 = smul.addr %s333, 8
      %s335 = scalar_lea.vmem %s5, %s334
      %p336 = scmp.eq.s32.totalorder %s22, 0
      // Predicated region
      $region29: #{fuse.2} parent=27 // pred_check
        %p337 = pneg %p336
      $region30: #{fuse.2} parent=27 // pred_check_branch
        %339 = sbr.rel (%p337) target = $region32
      $region31: #{fuse.2} parent=27 // pred_region
        %340 = vst [vmem:[%s320] sm:$0xff] 0.0
        %341 = vst [vmem:[%s320 + $0x8] sm:$0xff] 0.0
        %342 = vst [vmem:[%s325] sm:$0xff] 0.0
        %343 = vst [vmem:[%s325 + $0x8] sm:$0xff] 0.0
        %344 = vst [vmem:[%s330] sm:$0xff] 0.0
        %345 = vst [vmem:[%s330 + $0x8] sm:$0xff] 0.0
        %346 = vst [vmem:[%s335] sm:$0xff] 0.0
        %347 = vst [vmem:[%s335 + $0x8] sm:$0xff] 0.0
      $region32: #{fuse.2} parent=27 // pred_fallthru
        _
      %v348 = vld [vmem:[%s301] sm:$0xff]
      %v349 = vld [vmem:[%s301 + $0x8] sm:$0xff]
      %v350 = vld [vmem:[%s312] sm:$0xff]
      %v351 = vld [vmem:[%s312 + $0x8] sm:$0xff]
      %s352 = sadd.s32 %s21, %s22
      %s353 = smul.u32 %s352, 8
      %v354 = vlaneseq
      %v355 = vshrl.u32 %v354, 7
      %v356 = vstv %s353
      %v357 = vadd.s32 %v355, %v356
      %vm358 = vcmp.lt.s32.totalorder %v357, 8
      %v359 = vsel %vm358, 1, 0
      %vm360 = vcmp.eq.s32.totalorder %v359, 1
      %v361 = vsel %vm360, %v348, 0.0
      %v362 = vsel %vm360, %v349, 0.0
      %v363 = vsel %vm360, %v350, 0.0
      %v364 = vsel %vm360, %v351, 0.0
      %v365 = vld [vmem:[%s320] sm:$0xff]
      %v366 = vld [vmem:[%s320 + $0x8] sm:$0xff]
      %v367 = vadd.f32 %v361, 0.0
      %v368 = vadd.f32 %v362, 0.0
      %v369 = vadd.f32 %v365, %v367
      %v370 = vadd.f32 %v366, %v368
      %371 = vst [vmem:[%s320] sm:$0xff] %v369
      %372 = vst [vmem:[%s320 + $0x8] sm:$0xff] %v370
      %v373 = vld [vmem:[%s325] sm:$0xff]
      %v374 = vld [vmem:[%s325 + $0x8] sm:$0xff]
      %v375 = vmul.f32 %v361, %v361
      %v376 = vmul.f32 %v362, %v362
      %v377 = vadd.f32 %v375, 0.0
      %v378 = vadd.f32 %v376, 0.0
      %v379 = vadd.f32 %v373, %v377
      %v380 = vadd.f32 %v374, %v378
      %381 = vst [vmem:[%s325] sm:$0xff] %v379
      %382 = vst [vmem:[%s325 + $0x8] sm:$0xff] %v380
      %v383 = vld [vmem:[%s330] sm:$0xff]
      %v384 = vld [vmem:[%s330 + $0x8] sm:$0xff]
      %v385 = vadd.f32 %v363, 0.0
      %v386 = vadd.f32 %v364, 0.0
      %v387 = vadd.f32 %v383, %v385
      %v388 = vadd.f32 %v384, %v386
      %389 = vst [vmem:[%s330] sm:$0xff] %v387
      %390 = vst [vmem:[%s330 + $0x8] sm:$0xff] %v388
      %v391 = vld [vmem:[%s335] sm:$0xff]
      %v392 = vld [vmem:[%s335 + $0x8] sm:$0xff]
      %v393 = vmul.f32 %v363, %v363
      %v394 = vmul.f32 %v364, %v364
      %v395 = vadd.f32 %v393, 0.0
      %v396 = vadd.f32 %v394, 0.0
      %v397 = vadd.f32 %v391, %v395
      %v398 = vadd.f32 %v392, %v396
      %399 = vst [vmem:[%s335] sm:$0xff] %v397
      %400 = vst [vmem:[%s335 + $0x8] sm:$0xff] %v398
      %p401 = scmp.lt.s32.totalorder %s21, 1
      %s402 = scalar_select %p401, %s21, 1
      %s403 = smul.addr %s402, 2
      %s404 = smul.addr %s403, 8
      %s405 = scalar_lea.vmem %s2, %s404
      %p406 = scmp.lt.s32.totalorder %s21, 1
      %s407 = scalar_select %p406, %s21, 1
      %s408 = smul.addr %s407, 2
      %s409 = smul.addr %s408, 8
      %s410 = scalar_lea.vmem %s3, %s409
      %p411 = scmp.lt.s32.totalorder %s21, 1
      %s412 = scalar_select %p411, %s21, 1
      %s413 = smul.addr %s412, 2
      %s414 = smul.addr %s413, 8
      %s415 = scalar_lea.vmem %s4, %s414
      %p416 = scmp.lt.s32.totalorder %s21, 1
      %s417 = scalar_select %p416, %s21, 1
      %s418 = smul.addr %s417, 2
      %s419 = smul.addr %s418, 8
      %s420 = scalar_lea.vmem %s5, %s419
      // Predicated region
      $region33: #{fuse.2} parent=27 // pred_check
        %p421 = pneg %p111
      $region34: #{fuse.2} parent=27 // pred_check_branch
        %423 = sbr.rel (%p421) target = $region36
      $region35: #{fuse.2} parent=27 // pred_region
        _
      $region36: #{fuse.2} parent=27 // pred_fallthru
        _
      // Predicated region
      $region37: #{fuse.2} parent=27 // pred_check
        %p424 = pneg %p137
      $region38: #{fuse.2} parent=27 // pred_check_branch
        %426 = sbr.rel (%p424) target = $region40
      $region39: #{fuse.2} parent=27 // pred_region
        _
      $region40: #{fuse.2} parent=27 // pred_fallthru
        _
      // Predicated region
      $region41: #{fuse.2} parent=27 // pred_check
        %p427 = pneg %p163
      $region42: #{fuse.2} parent=27 // pred_check_branch
        %429 = sbr.rel (%p427) target = $region44
      $region43: #{fuse.2} parent=27 // pred_region
        _
      $region44: #{fuse.2} parent=27 // pred_fallthru
        _
      // Predicated region
      $region45: #{fuse.2} parent=27 // pred_check
        %p430 = pneg %p189
      $region46: #{fuse.2} parent=27 // pred_check_branch
        %432 = sbr.rel (%p430) target = $region48
      $region47: #{fuse.2} parent=27 // pred_region
        _
      $region48: #{fuse.2} parent=27 // pred_fallthru
        _
    $region28: #{fuse.2} parent=5 // pred_fallthru
      _
    %p433 = scmp.le.s32.totalorder 2, %s12
    // Predicated region
    $region49: #{fuse.2} parent=5 // pred_check
      %p434 = pneg %p433
    $region50: #{fuse.2} parent=5 // pred_check_branch
      %436 = sbr.rel (%p434) target = $region52
    $region51: #{fuse.2} parent=5 // pred_region
      %s437 = ssub.s32 %s12, 2
      // Predicated region
      $region53: #{fuse.2} parent=51 // pred_check
        %p438 = pneg %p117
      $region54: #{fuse.2} parent=51 // pred_check_branch
        %440 = sbr.rel (%p438) target = $region56
      $region55: #{fuse.2} parent=51 // pred_region
        %p441 = scmp.lt.s32.totalorder %s23, 1
        %s442 = scalar_select %p441, %s23, 1
        %s443 = smul.addr %s442, 2
        %s444 = smul.addr %s443, 8
        %s445 = scalar_lea.vmem %s2, %s444
      $region56: #{fuse.2} parent=51 // pred_fallthru
        _
      // Predicated region
      $region57: #{fuse.2} parent=51 // pred_check
        %p446 = pneg %p143
      $region58: #{fuse.2} parent=51 // pred_check_branch
        %448 = sbr.rel (%p446) target = $region60
      $region59: #{fuse.2} parent=51 // pred_region
        %p449 = scmp.lt.s32.totalorder %s23, 1
        %s450 = scalar_select %p449, %s23, 1
        %s451 = smul.addr %s450, 2
        %s452 = smul.addr %s451, 8
        %s453 = scalar_lea.vmem %s3, %s452
      $region60: #{fuse.2} parent=51 // pred_fallthru
        _
      // Predicated region
      $region61: #{fuse.2} parent=51 // pred_check
        %p454 = pneg %p169
      $region62: #{fuse.2} parent=51 // pred_check_branch
        %456 = sbr.rel (%p454) target = $region64
      $region63: #{fuse.2} parent=51 // pred_region
        %p457 = scmp.lt.s32.totalorder %s23, 1
        %s458 = scalar_select %p457, %s23, 1
        %s459 = smul.addr %s458, 2
        %s460 = smul.addr %s459, 8
        %s461 = scalar_lea.vmem %s4, %s460
      $region64: #{fuse.2} parent=51 // pred_fallthru
        _
      // Predicated region
      $region65: #{fuse.2} parent=51 // pred_check
        %p462 = pneg %p195
      $region66: #{fuse.2} parent=51 // pred_check_branch
        %464 = sbr.rel (%p462) target = $region68
      $region67: #{fuse.2} parent=51 // pred_region
        %p465 = scmp.lt.s32.totalorder %s23, 1
        %s466 = scalar_select %p465, %s23, 1
        %s467 = smul.addr %s466, 2
        %s468 = smul.addr %s467, 8
        %s469 = scalar_lea.vmem %s5, %s468
      $region68: #{fuse.2} parent=51 // pred_fallthru
        _
    $region52: #{fuse.2} parent=5 // pred_fallthru
      _
  $region6: #{fuse.2} parent=0 // loop_footer
    %s16 = sadd.s32 1, %s12
  $region7: #{fuse.2} parent=0 // loop_footer_branch
    %11 = sbr.rel target = $region3
  $region8: #{fuse.2} parent=0 // loop_exit
    _

// kernel: fuse.3
$region0: #{fuse.3}
  #allocation0 [shape = 'u32[]', space=smem, size = 0x4, offset = 0x4, fixed_abs, tag = 'smem constant byte address 0x4 - core index']
  #allocation1 [shape = 'u32[144,128]{1,0:T(1,128)}', space=vmem, size = 0x12000, scoped, tag = 'internal scratch']
  #allocation2 [shape = 'f32[1,1]{1,0:T(1,128)S(6)}', space=smem, size = 0x200, scoped, tag = 'scoped memory for fuse.3']
  %s0 = inlined_call_operand.<no memory space> [shape: f32[1,1], index: 0, kind: input, shape index: {}]
  %s1 = inlined_call_operand.vmem [shape: f32[8,256], index: 1, kind: input, shape index: {}]
  %s2 = inlined_call_operand.vmem [shape: f32[8,256], index: 2, kind: input, shape index: {}]
  %s3 = inlined_call_operand.vmem [shape: f32[8,256], index: 3, kind: output, shape index: {}]
  %s4 = sld [smem:[#allocation0]]
  $region22: #{fuse.3} parent=0
    _
  %s6 = ssub.s32 1, %s4
  %s7 = scalar_select 0, %s6, %s4
  %8 = sst [smem:[#allocation2]] %s0
  // Predicated region
  $region2: #{fuse.3} parent=0 // pred_check
    _
  $region3: #{fuse.3} parent=0 // pred_check_branch
    %10 = sbr.rel (0) target = $region5
  $region4: #{fuse.3} parent=0 // pred_region
    _
  $region5: #{fuse.3} parent=0 // pred_fallthru
    _
  // Predicated region
  $region6: #{fuse.3} parent=0 // pred_check
    _
  $region7: #{fuse.3} parent=0 // pred_check_branch
    %12 = sbr.rel (0) target = $region9
  $region8: #{fuse.3} parent=0 // pred_region
    _
  $region9: #{fuse.3} parent=0 // pred_fallthru
    _
  // Predicated region
  $region10: #{fuse.3} parent=0 // pred_check
    _
  $region11: #{fuse.3} parent=0 // pred_check_branch
    %14 = sbr.rel (0) target = $region13
  $region12: #{fuse.3} parent=0 // pred_region
    _
  $region13: #{fuse.3} parent=0 // pred_fallthru
    _
  %s15 = sld [smem:[#allocation2]]
  %s16 = ssub.f32 1.0, %s15
  %v17 = vld [vmem:[%s1] sm:$0xff]
  %v18 = vld [vmem:[%s1 + $0x8] sm:$0xff]
  %v19 = vstv %s15
  %v20 = vmul.f32 %v17, %v19
  %v21 = vmul.f32 %v18, %v19
  %v22 = vld [vmem:[%s2] sm:$0xff]
  %v23 = vld [vmem:[%s2 + $0x8] sm:$0xff]
  %v24 = vstv %s16
  %v25 = vmul.f32 %v22, %v24
  %v26 = vmul.f32 %v23, %v24
  %v27 = vadd.f32 %v20, %v25
  %v28 = vadd.f32 %v21, %v26
  %29 = vst [vmem:[%s3] sm:$0xff] %v27
  %30 = vst [vmem:[%s3 + $0x8] sm:$0xff] %v28
  // Predicated region
  $region14: #{fuse.3} parent=0 // pred_check
    _
  $region15: #{fuse.3} parent=0 // pred_check_branch
    %32 = sbr.rel (0) target = $region17
  $region16: #{fuse.3} parent=0 // pred_region
    _
  $region17: #{fuse.3} parent=0 // pred_fallthru
    _
  // Predicated region
  $region18: #{fuse.3} parent=0 // pred_check
    _
  $region19: #{fuse.3} parent=0 // pred_check_branch
    %34 = sbr.rel (0) target = $region21
  $region20: #{fuse.3} parent=0 // pred_region
    _
  $region21: #{fuse.3} parent=0 // pred_fallthru
    _

</llo_original>
